<compile_context>
chip_gen: v5e
topology: v5e:2x2
jax: 0.10.0
libtpu: 0.0.40
codegen_flags: <defaults>
</compile_context>

<pallas_src>
import functools

import jax
import jax.numpy as jnp
from jax import lax
from jax.experimental import pallas as pl
from jax.experimental.pallas import tpu as pltpu


def _rmsnorm_kernel(x_ref, g_ref, o_ref, *, eps, scale):
    # x_ref: (tm, D) tile of rows; g_ref: (1, D) gain (broadcast over rows)
    x = x_ref[...].astype(jnp.float32)
    g = g_ref[...].astype(jnp.float32)
    # F.normalize(x, dim=-1, eps): x / max(||x||_2, eps), then * g * sqrt(dim).
    ss = jnp.sum(x * x, axis=-1, keepdims=True)            # (tm, 1) row-reduce (XLU)
    # max(sqrt(ss), eps) == sqrt(max(ss, eps^2)); rsqrt on the narrow column
    # goes to the EUP slot and the static sqrt(dim) scale folds into it.
    inv = lax.rsqrt(jnp.maximum(ss, eps * eps)) * scale     # (tm, 1)
    o_ref[...] = ((x * inv) * g).astype(o_ref.dtype)


def _pick_tile_rows(n_rows, dim, in_bytes, out_bytes, vmem_budget_bytes):
    """Largest row tile fitting the VMEM budget (double-buffered I/O + f32 temps)."""
    # 2x input (double buffer) + 2x output (double buffer) + ~2 f32 intermediates.
    per_row_bytes = dim * (2 * in_bytes + 2 * out_bytes + 2 * 4)
    t = max(8, vmem_budget_bytes // max(per_row_bytes, 1))
    t = min(t, 1024)
    if t >= n_rows:
        return n_rows                 # full extent is always a legal block shape
    return max(8, (t // 8) * 8)       # keep (8, 128)-friendly sublane multiple


def rmsnorm(x, g, *, eps=1e-8, tile_rows=None):
    """x: (..., dim), g: (dim,). Returns same shape/dtype as x."""
    orig_shape = x.shape
    dim = orig_shape[-1]
    scale = float(dim) ** 0.5

    x2d = x.reshape(-1, dim)
    n_rows = x2d.shape[0]
    g2d = g.reshape(1, dim)

    itemsize = jnp.dtype(x.dtype).itemsize
    if tile_rows is None:
        # ~24 MiB working-set budget: fits the 32 MiB scoped default on v6e/v7x
        # and the explicit 48 MiB limit below; conservative for v5e too.
        tile_rows = _pick_tile_rows(n_rows, dim, itemsize, itemsize,
                                    vmem_budget_bytes=24 * 1024 * 1024)
    else:
        tile_rows = max(1, min(tile_rows, n_rows))

    grid = (pl.cdiv(n_rows, tile_rows),)
    kernel = functools.partial(_rmsnorm_kernel, eps=eps, scale=scale)

    out2d = pl.pallas_call(
        kernel,
        out_shape=jax.ShapeDtypeStruct((n_rows, dim), x.dtype),
        grid_spec=pltpu.PrefetchScalarGridSpec(
            num_scalar_prefetch=0,
            grid=grid,
            in_specs=[
                pl.BlockSpec((tile_rows, dim), lambda i: (i, 0)),
                pl.BlockSpec((1, dim), lambda i: (0, 0)),
            ],
            out_specs=pl.BlockSpec((tile_rows, dim), lambda i: (i, 0)),
        ),
        compiler_params=pltpu.CompilerParams(
            dimension_semantics=("parallel",),
            vmem_limit_bytes=48 * 1024 * 1024,
        ),
    )(x2d, g2d)

    return out2d.reshape(orig_shape)


if __name__ == "__main__":
    key = jax.random.PRNGKey(0)
    batch, seq, hidden = 2, 8, 32

    x = jax.random.normal(key, (batch, seq, hidden), dtype=jnp.float32)
    # Deterministic parameter init: nn.Parameter(torch.ones(dim))
    g = jnp.ones((hidden,), dtype=jnp.float32)

    out = rmsnorm(x, g, eps=1e-8)
    out = jax.block_until_ready(out)

    # Reference check in plain JAX (same math as the PyTorch module).
    l2 = jnp.sqrt(jnp.sum(x.astype(jnp.float32) ** 2, axis=-1, keepdims=True))
    ref = x / jnp.maximum(l2, 1e-8) * g * (hidden ** 0.5)
    assert jnp.allclose(out, ref, atol=1e-4, rtol=1e-4), "mismatch vs reference"

    print("KERNEL_OK")
</pallas_src>

<mosaic_0001>
module attributes {stable_mosaic.version = 11 : i64} {
  func.func @_rmsnorm_kernel(%arg0: i32, %arg1: memref<16x32xf32, #tpu.memory_space<vmem>>, %arg2: memref<1x32xf32, #tpu.memory_space<vmem>>, %arg3: memref<16x32xf32, #tpu.memory_space<vmem>>) attributes {dimension_semantics = [#tpu.dimension_semantics<parallel>], iteration_bounds = array<i64: 1>, scalar_prefetch = 0 : i64, scratch_operands = 0 : i64, tpu.core_type = #tpu.core_type<tc>, window_params = [{transform_indices = @transform_0, window_bounds = array<i64: 16, 32>}, {pipeline_mode = #tpu.pipeline_mode<synchronous>, transform_indices = @transform_1, window_bounds = array<i64: 1, 32>}, {transform_indices = @transform_2, window_bounds = array<i64: 16, 32>}]} {
    %c0 = arith.constant 0 : index
    %c0_0 = arith.constant 0 : index
    %0 = vector.load %arg1[%c0, %c0_0] : memref<16x32xf32, #tpu.memory_space<vmem>>, vector<16x32xf32>
    %c0_1 = arith.constant 0 : index
    %c0_2 = arith.constant 0 : index
    %1 = vector.load %arg2[%c0_1, %c0_2] : memref<1x32xf32, #tpu.memory_space<vmem>>, vector<1x32xf32>
    %2 = arith.mulf %0, %0 : vector<16x32xf32>
    %cst = arith.constant dense<0.000000e+00> : vector<16xf32>
    %3 = vector.multi_reduction <add>, %2, %cst [1] : vector<16x32xf32> to vector<16xf32>
    %4 = vector.shape_cast %3 : vector<16xf32> to vector<16x1xf32>
    %cst_3 = arith.constant 1.000000e-16 : f32
    %5 = vector.broadcast %cst_3 : f32 to vector<16x1xf32>
    %6 = arith.maximumf %4, %5 : vector<16x1xf32>
    %7 = math.rsqrt %6 : vector<16x1xf32>
    %cst_4 = arith.constant 5.65685415 : f32
    %8 = vector.broadcast %cst_4 : f32 to vector<16x1xf32>
    %9 = arith.mulf %7, %8 : vector<16x1xf32>
    %10 = vector.broadcast %9 : vector<16x1xf32> to vector<16x32xf32>
    %11 = arith.mulf %0, %10 : vector<16x32xf32>
    %12 = vector.broadcast %1 : vector<1x32xf32> to vector<16x32xf32>
    %13 = arith.mulf %11, %12 : vector<16x32xf32>
    %c0_5 = arith.constant 0 : index
    %c0_6 = arith.constant 0 : index
    %14 = vector.load %arg3[%c0_5, %c0_6] : memref<16x32xf32, #tpu.memory_space<vmem>>, vector<16x32xf32>
    tpu.vector_store %arg3[%c0_5, %c0_6], %13 {strides = array<i32>} : memref<16x32xf32, #tpu.memory_space<vmem>>, vector<16x32xf32>,
    return
  }
  func.func @transform_0(%arg0: i32) -> (i32, i32) {
    %c0_i32 = arith.constant 0 : i32
    %c0_i32_0 = arith.constant 0 : i32
    return %arg0, %c0_i32 : i32, i32
  }
  func.func @transform_1(%arg0: i32) -> (i32, i32) {
    %c0_i32 = arith.constant 0 : i32
    %c0_i32_0 = arith.constant 0 : i32
    %c0_i32_1 = arith.constant 0 : i32
    return %c0_i32, %c0_i32_0 : i32, i32
  }
  func.func @transform_2(%arg0: i32) -> (i32, i32) {
    %c0_i32 = arith.constant 0 : i32
    %c0_i32_0 = arith.constant 0 : i32
    return %arg0, %c0_i32 : i32, i32
  }
}

</mosaic_0001>

<llo_original>
// kernel: tpu_custom_call.1
$region0: #{tpu_custom_call.1}
  #allocation0 [shape = 'u32[]', space=smem, size = 0x4, offset = 0x4, fixed_abs, tag = 'smem constant byte address 0x4 - core index']
  #allocation1 [shape = 'u32[72,128]{1,0:T(1,128)}', space=vmem, size = 0x9000, scoped, tag = 'internal scratch']
  %s0 = inlined_call_operand.hbm [shape: f32[16,32], index: 0, kind: input, shape index: {}]
  %s1 = inlined_call_operand.hbm [shape: f32[1,32], index: 1, kind: input, shape index: {}]
  %s2 = inlined_call_operand.hbm [shape: f32[16,32], index: 2, kind: output, shape index: {}]
  %s3 = sld [smem:[#allocation0]]
  $region26: #{tpu_custom_call.1} parent=0
    _
  %s5 = ssub.s32 1, %s3
  %s6 = scalar_select 0, %s5, %s3
  $region1: #{tpu_custom_call.1} parent=0
    #allocation2 [shape = 'u8[8192]{0}', space=vmem, size = 0x2000, scoped, tag = 'input window, operand 0, single buffered']
    #allocation3 [shape = 's32[1]{0}', space=sflag, size = 0x4, scoped, tag = 'scoped memory for tpu_custom_call.1']
    #allocation4 [shape = 's32[1]{0}', space=sflag, size = 0x4, scoped, tag = 'scoped memory for tpu_custom_call.1']
    #allocation5 [shape = 'u8[512]{0}', space=vmem, size = 0x400, scoped, tag = 'input window, operand 1, single buffered']
    #allocation6 [shape = 's32[1]{0}', space=sflag, size = 0x4, scoped, tag = 'scoped memory for tpu_custom_call.1']
    #allocation7 [shape = 'u8[8192]{0}', space=vmem, size = 0x2000, scoped, tag = 'output window, operand 0, single buffered']
    %7 = vsyncpa [#allocation3], 0
    %8 = vsyncpa [#allocation6], 0
    %9 = vsyncpa [#allocation4], 0
    // Predicated region
    $region2: #{tpu_custom_call.1} parent=1 // pred_check
      _
    $region3: #{tpu_custom_call.1} parent=1 // pred_check_branch
      %11 = sbr.rel (0) target = $region5
    $region4: #{tpu_custom_call.1} parent=1 // pred_region
      %13 = vsyncadd [#allocation3], 0
      %s14 = sshll.u32 %s0, 4
      %s15 = int_to_ptr.hbm [resolvable:$true] %s14
      %s16 = sshll.u32 [#allocation2], 4
      %s17 = int_to_ptr.vmem [resolvable:$true] %s16
      %22 = dma.hbm_to_vmem [thread:$0]  %s15, 256, %s17, [#allocation3], 128, 128, 8
    $region5: #{tpu_custom_call.1} parent=1 // pred_fallthru
      _
    // Predicated region
    $region6: #{tpu_custom_call.1} parent=1 // pred_check
      _
    $region7: #{tpu_custom_call.1} parent=1 // pred_check_branch
      %24 = sbr.rel (0) target = $region9
    $region8: #{tpu_custom_call.1} parent=1 // pred_region
      %26 = vsyncadd [#allocation6], 0
      %s28 = sshll.u32 %s1, 4
      %s29 = int_to_ptr.hbm [resolvable:$true] %s28
      %s30 = sshll.u32 [#allocation5], 4
      %s31 = int_to_ptr.vmem [resolvable:$true] %s30
      %33 = dma.hbm_to_vmem [thread:$0]  %s29, 16, %s31, [#allocation6]
    $region9: #{tpu_custom_call.1} parent=1 // pred_fallthru
      _
    // Predicated region
    $region10: #{tpu_custom_call.1} parent=1 // pred_check
      _
    $region11: #{tpu_custom_call.1} parent=1 // pred_check_branch
      %35 = sbr.rel (0) target = $region13
    $region12: #{tpu_custom_call.1} parent=1 // pred_region
      %37 = dma.done [#allocation3], 256
    $region13: #{tpu_custom_call.1} parent=1 // pred_fallthru
      _
    // Predicated region
    $region14: #{tpu_custom_call.1} parent=1 // pred_check
      _
    $region15: #{tpu_custom_call.1} parent=1 // pred_check_branch
      %39 = sbr.rel (0) target = $region17
    $region16: #{tpu_custom_call.1} parent=1 // pred_region
      %41 = dma.done [#allocation6], 16
    $region17: #{tpu_custom_call.1} parent=1 // pred_fallthru
      _
    %v42 = vld [vmem:[#allocation2] sm:$0xff]
    %v43 = vld [vmem:[#allocation2 + $0x8] sm:$0xff]
    %v44 = vld [vmem:[#allocation5] sm:$0x1]
    %v45 = vmul.f32 %v42, %v42
    %v46 = vmul.f32 %v43, %v43
    %vm47 = vcmask 261120
    %v48 = vsel %vm47, %v45, 0.0
    %49 = vadd.xlane.f32.xlu0 %v48
    %v50 = vpop.xlane.xlu0 %49
    %v51 = vsel %vm47, %v46, 0.0
    %52 = vadd.xlane.f32.xlu0 %v51
    %v53 = vpop.xlane.xlu0 %52
    %v54 = vmax.f32 %v50, 1e-16
    %v55 = vmax.f32 %v53, 1e-16
    %v56 = vrsqrt.pop %v54
    %v57 = vmul.f32 %v56, %v54
    %v58 = vmul.f32 %v57, %v56
    %v59 = vmul.f32 0.5, %v58
    %v60 = vsub.f32 1.5, %v59
    %v61 = vmul.f32 %v56, %v60
    %vm62 = vweird.f32 %v54
    %vm63 = vweird.f32 %v56
    %vm64 = vmor %vm62, %vm63
    %v65 = vsel %vm64, %v56, %v61
    %v66 = vrsqrt.pop %v55
    %v67 = vmul.f32 %v66, %v55
    %v68 = vmul.f32 %v67, %v66
    %v69 = vmul.f32 0.5, %v68
    %v70 = vsub.f32 1.5, %v69
    %v71 = vmul.f32 %v66, %v70
    %vm72 = vweird.f32 %v55
    %vm73 = vweird.f32 %v66
    %vm74 = vmor %vm72, %vm73
    %v75 = vsel %vm74, %v66, %v71
    %v76 = vmul.f32 %v65, 5.656854
    %v77 = vmul.f32 %v75, 5.656854
    %v78 = vmul.f32 %v42, %v76
    %v79 = vmul.f32 %v43, %v77
    %v81 = vperm.slane %v44, 0
    %v83 = vmul.f32 %v78, %v81
    %v84 = vmul.f32 %v79, %v81
    %85 = vst.msk [vmem:[#allocation7] sm:$0xff] %vm47, %v83
    %86 = vst.msk [vmem:[#allocation7 + $0x8] sm:$0xff] %vm47, %v84
    // Predicated region
    $region18: #{tpu_custom_call.1} parent=1 // pred_check
      _
    $region19: #{tpu_custom_call.1} parent=1 // pred_check_branch
      %88 = sbr.rel (0) target = $region21
    $region20: #{tpu_custom_call.1} parent=1 // pred_region
      %90 = vsyncadd [#allocation4], 0
      %s91 = sshll.u32 [#allocation7], 4
      %s92 = int_to_ptr.vmem [resolvable:$true] %s91
      %s93 = sshll.u32 %s2, 4
      %s94 = int_to_ptr.hbm [resolvable:$true] %s93
      %99 = dma.vmem_to_hbm [thread:$0]  %s92, 256, %s94, [#allocation4], 128, 128, 8
    $region21: #{tpu_custom_call.1} parent=1 // pred_fallthru
      _
    // Predicated region
    $region22: #{tpu_custom_call.1} parent=1 // pred_check
      _
    $region23: #{tpu_custom_call.1} parent=1 // pred_check_branch
      %101 = sbr.rel (0) target = $region25
    $region24: #{tpu_custom_call.1} parent=1 // pred_region
      %103 = dma.done [#allocation4], 256
    $region25: #{tpu_custom_call.1} parent=1 // pred_fallthru
      _
    %104 = vsyncpa [#allocation3], 1
    %105 = vsyncpa [#allocation6], 1
    %106 = vsyncpa [#allocation4], 1

</llo_original>
